<compile_context>
chip_gen: v7x
topology: tpu7x:2x2x1
jax: 0.10.0
libtpu: 0.0.40
codegen_flags: <defaults>
</compile_context>

<pallas_src>
import jax
import jax.numpy as jnp
from jax.experimental import pallas as pl
from jax.experimental.pallas import tpu as pltpu

H1, H2 = 400, 300


def critic_kernel(s_ref, a_ref, w1s_ref, w1a_ref, b1_ref,
                  w2_ref, b2_ref, w3_ref, b3_ref, o_ref):
    # ----- layer 1: split matmul (replaces concat), bf16 MXU inputs, f32 acc ----
    s = s_ref[...].astype(jnp.bfloat16)
    a = a_ref[...].astype(jnp.bfloat16)
    h1 = (jnp.dot(s, w1s_ref[...], preferred_element_type=jnp.float32)
          + jnp.dot(a, w1a_ref[...], preferred_element_type=jnp.float32)
          + b1_ref[...])                               # f32 bias add
    h1 = jnp.maximum(h1, 0.0)                          # f32 ReLU

    # ----- layer 2: bf16 MXU, f32 acc -----
    h2 = jnp.dot(h1.astype(jnp.bfloat16), w2_ref[...],
                 preferred_element_type=jnp.float32) + b2_ref[...]
    h2 = jnp.maximum(h2, 0.0)

    # ----- layer 3 (out_features == 1): VPU mul + lane reduce, no N=1 matmul ----
    q = jnp.sum(h2 * w3_ref[...], axis=-1, keepdims=True) + b3_ref[...]
    o_ref[...] = q.astype(o_ref.dtype)


def pack_critic_params(params, state_dim):
    """One-time prep: split W1 along its input dim; cast matmul weights to bf16.

    W3 is kept f32 and reshaped to a (1, 300) row for the in-kernel lane reduce.
    """
    w1, b1, w2, b2, w3, b3 = params
    return (
        w1[:state_dim].astype(jnp.bfloat16),    # (S, 400)
        w1[state_dim:].astype(jnp.bfloat16),    # (A, 400)
        b1.reshape(1, -1).astype(jnp.float32),  # (1, 400)
        w2.astype(jnp.bfloat16),                # (400, 300)
        b2.reshape(1, -1).astype(jnp.float32),  # (1, 300)
        w3.reshape(1, -1).astype(jnp.float32),  # (1, 300)
        b3.reshape(1, 1).astype(jnp.float32),   # (1, 1)
    )


def critic_forward(state, action, packed_params, *, batch_tile=256):
    """Fused Critic forward: state (B,S) f32, action (B,A) f32 -> q (B,1) f32."""
    w1s, w1a, b1, w2, b2, w3, b3 = packed_params
    B, state_dim = state.shape
    action_dim = action.shape[1]

    # Batch tiling: a single full block for small B, 256-row tiles otherwise,
    # padded so the grid divides evenly (padded rows compute garbage and are
    # sliced off on return).
    if B <= batch_tile:
        tb, b_pad = B, B
    else:
        tb = batch_tile
        b_pad = pl.cdiv(B, tb) * tb
        if b_pad != B:
            pad = ((0, b_pad - B), (0, 0))
            state = jnp.pad(state, pad)
            action = jnp.pad(action, pad)

    grid = (b_pad // tb,)

    def act_spec(feat):
        # Streaming activation tiles: block index advances with the grid.
        return pl.BlockSpec((tb, feat), lambda i: (i, 0))

    def resident(arr):
        # Weights/biases: constant block index -> fetched into VMEM once.
        nd = arr.ndim
        return pl.BlockSpec(arr.shape, lambda i: (0,) * nd)

    in_dim = state_dim + action_dim
    flops = 2 * b_pad * (in_dim * H1 + H1 * H2 + H2)
    bytes_accessed = (
        sum(int(x.size) * x.dtype.itemsize for x in packed_params)
        + (int(state.size) + int(action.size)) * 4
        + b_pad * 4
    )

    out = pl.pallas_call(
        critic_kernel,
        out_shape=jax.ShapeDtypeStruct((b_pad, 1), jnp.float32),
        grid=grid,
        in_specs=[
            act_spec(state_dim), act_spec(action_dim),
            resident(w1s), resident(w1a), resident(b1),
            resident(w2), resident(b2),
            resident(w3), resident(b3),
        ],
        out_specs=pl.BlockSpec((tb, 1), lambda i: (i, 0)),
        compiler_params=pltpu.CompilerParams(
            dimension_semantics=("parallel",),   # batch blocks are independent
        ),
        cost_estimate=pl.CostEstimate(
            flops=flops, transcendentals=0, bytes_accessed=bytes_accessed),
    )(state, action, w1s, w1a, b1, w2, b2, w3, b3)

    return out[:B] if b_pad != B else out


def init_critic_params(key, state_dim, action_dim):
    """PyTorch nn.Linear default init: U[-1/sqrt(fan_in), 1/sqrt(fan_in)]."""
    dims = [(state_dim + action_dim, H1), (H1, H2), (H2, 1)]
    params = []
    for (fan_in, fan_out) in dims:
        key, kw, kb = jax.random.split(key, 3)
        bound = 1.0 / jnp.sqrt(float(fan_in))
        w = jax.random.uniform(kw, (fan_in, fan_out), jnp.float32, -bound, bound)
        b = jax.random.uniform(kb, (1, fan_out), jnp.float32, -bound, bound)
        params += [w, b]
    return tuple(params)


if __name__ == "__main__":
    B, state_dim, action_dim = 8, 16, 4

    key = jax.random.PRNGKey(0)
    kp, ks, ka = jax.random.split(key, 3)

    params = init_critic_params(kp, state_dim, action_dim)
    packed = pack_critic_params(params, state_dim)

    state = jax.random.normal(ks, (B, state_dim), jnp.float32)
    action = jax.random.normal(ka, (B, action_dim), jnp.float32)

    q = critic_forward(state, action, packed)
    jax.block_until_ready(q)

    # Sanity: pure-JAX f32 reference of the same math (bf16 matmul inputs in the
    # kernel -> relaxed tolerance).
    w1, b1, w2, b2, w3, b3 = params
    x = jnp.concatenate([state, action], axis=1)
    ref = jnp.maximum(x @ w1 + b1, 0.0)
    ref = jnp.maximum(ref @ w2 + b2, 0.0)
    ref = ref @ w3 + b3

    assert q.shape == (B, 1)
    assert jnp.allclose(q, ref, atol=3e-2, rtol=3e-2), (
        f"max abs err {jnp.max(jnp.abs(q - ref))}")

    print("KERNEL_OK")
</pallas_src>

<mosaic_0001>
module attributes {stable_mosaic.version = 11 : i64} {
  func.func @critic_kernel(%arg0: i32, %arg1: memref<8x16xf32, #tpu.memory_space<vmem>>, %arg2: memref<8x4xf32, #tpu.memory_space<vmem>>, %arg3: memref<16x400xbf16, #tpu.memory_space<vmem>>, %arg4: memref<4x400xbf16, #tpu.memory_space<vmem>>, %arg5: memref<1x400xf32, #tpu.memory_space<vmem>>, %arg6: memref<400x300xbf16, #tpu.memory_space<vmem>>, %arg7: memref<1x300xf32, #tpu.memory_space<vmem>>, %arg8: memref<1x300xf32, #tpu.memory_space<vmem>>, %arg9: memref<1x1xf32, #tpu.memory_space<vmem>>, %arg10: memref<8x1xf32, #tpu.memory_space<vmem>>) attributes {dimension_semantics = [#tpu.dimension_semantics<parallel>], iteration_bounds = array<i64: 1>, scalar_prefetch = 0 : i64, scratch_operands = 0 : i64, tpu.core_type = #tpu.core_type<tc>, window_params = [{transform_indices = @transform_0, window_bounds = array<i64: 8, 16>}, {transform_indices = @transform_1, window_bounds = array<i64: 8, 4>}, {pipeline_mode = #tpu.pipeline_mode<synchronous>, transform_indices = @transform_2, window_bounds = array<i64: 16, 400>}, {pipeline_mode = #tpu.pipeline_mode<synchronous>, transform_indices = @transform_3, window_bounds = array<i64: 4, 400>}, {pipeline_mode = #tpu.pipeline_mode<synchronous>, transform_indices = @transform_4, window_bounds = array<i64: 1, 400>}, {pipeline_mode = #tpu.pipeline_mode<synchronous>, transform_indices = @transform_5, window_bounds = array<i64: 400, 300>}, {pipeline_mode = #tpu.pipeline_mode<synchronous>, transform_indices = @transform_6, window_bounds = array<i64: 1, 300>}, {pipeline_mode = #tpu.pipeline_mode<synchronous>, transform_indices = @transform_7, window_bounds = array<i64: 1, 300>}, {pipeline_mode = #tpu.pipeline_mode<synchronous>, transform_indices = @transform_8, window_bounds = array<i64: 1, 1>}, {transform_indices = @transform_9, window_bounds = array<i64: 8, 1>}]} {
    %c0 = arith.constant 0 : index
    %c0_0 = arith.constant 0 : index
    %0 = vector.load %arg1[%c0, %c0_0] : memref<8x16xf32, #tpu.memory_space<vmem>>, vector<8x16xf32>
    %1 = arith.truncf %0 : vector<8x16xf32> to vector<8x16xbf16>
    %c0_1 = arith.constant 0 : index
    %c0_2 = arith.constant 0 : index
    %2 = vector.load %arg2[%c0_1, %c0_2] : memref<8x4xf32, #tpu.memory_space<vmem>>, vector<8x4xf32>
    %3 = arith.truncf %2 : vector<8x4xf32> to vector<8x4xbf16>
    %c0_3 = arith.constant 0 : index
    %c0_4 = arith.constant 0 : index
    %4 = vector.load %arg3[%c0_3, %c0_4] : memref<16x400xbf16, #tpu.memory_space<vmem>>, vector<16x400xbf16>
    %cst = arith.constant dense<0.000000e+00> : vector<8x400xf32>
    %5 = tpu.matmul %1, %4, %cst {dimension_numbers = #tpu.dot_dimension_numbers<[1], [0], [0], [1], [0, 0, 1, 1], [], []>} : vector<8x16xbf16>, vector<16x400xbf16>, vector<8x400xf32> -> vector<8x400xf32>
    %c0_5 = arith.constant 0 : index
    %c0_6 = arith.constant 0 : index
    %6 = vector.load %arg4[%c0_5, %c0_6] : memref<4x400xbf16, #tpu.memory_space<vmem>>, vector<4x400xbf16>
    %cst_7 = arith.constant dense<0.000000e+00> : vector<8x400xf32>
    %7 = tpu.matmul %3, %6, %cst_7 {dimension_numbers = #tpu.dot_dimension_numbers<[1], [0], [0], [1], [0, 0, 1, 1], [], []>} : vector<8x4xbf16>, vector<4x400xbf16>, vector<8x400xf32> -> vector<8x400xf32>
    %8 = arith.addf %5, %7 : vector<8x400xf32>
    %c0_8 = arith.constant 0 : index
    %c0_9 = arith.constant 0 : index
    %9 = vector.load %arg5[%c0_8, %c0_9] : memref<1x400xf32, #tpu.memory_space<vmem>>, vector<1x400xf32>
    %10 = vector.broadcast %9 : vector<1x400xf32> to vector<8x400xf32>
    %11 = arith.addf %8, %10 : vector<8x400xf32>
    %cst_10 = arith.constant 0.000000e+00 : f32
    %12 = vector.broadcast %cst_10 : f32 to vector<8x400xf32>
    %13 = arith.maximumf %11, %12 : vector<8x400xf32>
    %14 = arith.truncf %13 : vector<8x400xf32> to vector<8x400xbf16>
    %c0_11 = arith.constant 0 : index
    %c0_12 = arith.constant 0 : index
    %15 = vector.load %arg6[%c0_11, %c0_12] : memref<400x300xbf16, #tpu.memory_space<vmem>>, vector<400x300xbf16>
    %cst_13 = arith.constant dense<0.000000e+00> : vector<8x300xf32>
    %16 = tpu.matmul %14, %15, %cst_13 {dimension_numbers = #tpu.dot_dimension_numbers<[1], [0], [0], [1], [0, 0, 1, 1], [], []>} : vector<8x400xbf16>, vector<400x300xbf16>, vector<8x300xf32> -> vector<8x300xf32>
    %c0_14 = arith.constant 0 : index
    %c0_15 = arith.constant 0 : index
    %17 = vector.load %arg7[%c0_14, %c0_15] : memref<1x300xf32, #tpu.memory_space<vmem>>, vector<1x300xf32>
    %18 = vector.broadcast %17 : vector<1x300xf32> to vector<8x300xf32>
    %19 = arith.addf %16, %18 : vector<8x300xf32>
    %cst_16 = arith.constant 0.000000e+00 : f32
    %20 = vector.broadcast %cst_16 : f32 to vector<8x300xf32>
    %21 = arith.maximumf %19, %20 : vector<8x300xf32>
    %c0_17 = arith.constant 0 : index
    %c0_18 = arith.constant 0 : index
    %22 = vector.load %arg8[%c0_17, %c0_18] : memref<1x300xf32, #tpu.memory_space<vmem>>, vector<1x300xf32>
    %23 = vector.broadcast %22 : vector<1x300xf32> to vector<8x300xf32>
    %24 = arith.mulf %21, %23 : vector<8x300xf32>
    %cst_19 = arith.constant dense<0.000000e+00> : vector<8xf32>
    %25 = vector.multi_reduction <add>, %24, %cst_19 [1] : vector<8x300xf32> to vector<8xf32>
    %26 = vector.shape_cast %25 : vector<8xf32> to vector<8x1xf32>
    %c0_20 = arith.constant 0 : index
    %c0_21 = arith.constant 0 : index
    %27 = vector.load %arg9[%c0_20, %c0_21] : memref<1x1xf32, #tpu.memory_space<vmem>>, vector<1x1xf32>
    %28 = vector.broadcast %27 : vector<1x1xf32> to vector<8x1xf32>
    %29 = arith.addf %26, %28 : vector<8x1xf32>
    %c0_22 = arith.constant 0 : index
    %c0_23 = arith.constant 0 : index
    %30 = vector.load %arg10[%c0_22, %c0_23] : memref<8x1xf32, #tpu.memory_space<vmem>>, vector<8x1xf32>
    tpu.vector_store %arg10[%c0_22, %c0_23], %29 {strides = array<i32>} : memref<8x1xf32, #tpu.memory_space<vmem>>, vector<8x1xf32>,
    return
  }
  func.func @transform_0(%arg0: i32) -> (i32, i32) {
    %c0_i32 = arith.constant 0 : i32
    %c0_i32_0 = arith.constant 0 : i32
    return %arg0, %c0_i32 : i32, i32
  }
  func.func @transform_1(%arg0: i32) -> (i32, i32) {
    %c0_i32 = arith.constant 0 : i32
    %c0_i32_0 = arith.constant 0 : i32
    return %arg0, %c0_i32 : i32, i32
  }
  func.func @transform_2(%arg0: i32) -> (i32, i32) {
    %c0_i32 = arith.constant 0 : i32
    %c0_i32_0 = arith.constant 0 : i32
    %c0_i32_1 = arith.constant 0 : i32
    return %c0_i32, %c0_i32_0 : i32, i32
  }
  func.func @transform_3(%arg0: i32) -> (i32, i32) {
    %c0_i32 = arith.constant 0 : i32
    %c0_i32_0 = arith.constant 0 : i32
    %c0_i32_1 = arith.constant 0 : i32
    return %c0_i32, %c0_i32_0 : i32, i32
  }
  func.func @transform_4(%arg0: i32) -> (i32, i32) {
    %c0_i32 = arith.constant 0 : i32
    %c0_i32_0 = arith.constant 0 : i32
    %c0_i32_1 = arith.constant 0 : i32
    return %c0_i32, %c0_i32_0 : i32, i32
  }
  func.func @transform_5(%arg0: i32) -> (i32, i32) {
    %c0_i32 = arith.constant 0 : i32
    %c0_i32_0 = arith.constant 0 : i32
    %c0_i32_1 = arith.constant 0 : i32
    return %c0_i32, %c0_i32_0 : i32, i32
  }
  func.func @transform_6(%arg0: i32) -> (i32, i32) {
    %c0_i32 = arith.constant 0 : i32
    %c0_i32_0 = arith.constant 0 : i32
    %c0_i32_1 = arith.constant 0 : i32
    return %c0_i32, %c0_i32_0 : i32, i32
  }
  func.func @transform_7(%arg0: i32) -> (i32, i32) {
    %c0_i32 = arith.constant 0 : i32
    %c0_i32_0 = arith.constant 0 : i32
    %c0_i32_1 = arith.constant 0 : i32
    return %c0_i32, %c0_i32_0 : i32, i32
  }
  func.func @transform_8(%arg0: i32) -> (i32, i32) {
    %c0_i32 = arith.constant 0 : i32
    %c0_i32_0 = arith.constant 0 : i32
    %c0_i32_1 = arith.constant 0 : i32
    return %c0_i32, %c0_i32_0 : i32, i32
  }
  func.func @transform_9(%arg0: i32) -> (i32, i32) {
    %c0_i32 = arith.constant 0 : i32
    %c0_i32_0 = arith.constant 0 : i32
    return %arg0, %c0_i32 : i32, i32
  }
}

</mosaic_0001>

<llo_original>
// kernel: tpu_custom_call.1
$region0: #{tpu_custom_call.1}
  #allocation0 [shape = 'u32[]', space=smem, size = 0x4, offset = 0x4, fixed_abs, tag = 'smem constant byte address 0x4 - core index']
  #allocation1 [shape = 'u32[144,128]{1,0:T(1,128)}', space=vmem, size = 0x12000, scoped, tag = 'internal scratch']
  #allocation2 [shape = 'f32[1,1]{1,0:T(1,128)S(1)}', space=vmem, size = 0x200, scoped, tag = 'scoped memory for tpu_custom_call.1']
  %s0 = inlined_call_operand.vmem [shape: f32[8,16], index: 0, kind: input, shape index: {}]
  %s1 = inlined_call_operand.vmem [shape: f32[8,4], index: 1, kind: input, shape index: {}]
  %s2 = inlined_call_operand.hbm [shape: bf16[16,400], index: 2, kind: input, shape index: {}]
  %s3 = inlined_call_operand.vmem [shape: bf16[4,400], index: 3, kind: input, shape index: {}]
  %s4 = inlined_call_operand.vmem [shape: f32[1,400], index: 4, kind: input, shape index: {}]
  %s5 = inlined_call_operand.hbm [shape: bf16[400,300], index: 5, kind: input, shape index: {}]
  %s6 = inlined_call_operand.vmem [shape: f32[1,300], index: 6, kind: input, shape index: {}]
  %s7 = inlined_call_operand.vmem [shape: f32[1,300], index: 7, kind: input, shape index: {}]
  %s8 = inlined_call_operand.<no memory space> [shape: f32[1,1], index: 8, kind: input, shape index: {}]
  %s9 = inlined_call_operand.vmem [shape: f32[8,1], index: 9, kind: output, shape index: {}]
  %s10 = sld [smem:[#allocation0]]
  $region54: #{tpu_custom_call.1} parent=0
    _
  %s12 = ssub.s32 1, %s10
  %s13 = scalar_select 0, %s12, %s10
  %v14 = vstv %s8
  %15 = vst [vmem:[#allocation2] sm:$0x1] %v14
  $region1: #{tpu_custom_call.1} parent=0
    #allocation3 [shape = 'u8[16384]{0}', space=vmem, size = 0x4000, scoped, tag = 'input window, operand 2, single buffered']
    #allocation4 [shape = 's32[1]{0}', space=sflag, size = 0x4, scoped, tag = 'scoped memory for tpu_custom_call.1']
    #allocation5 [shape = 'u8[307200]{0}', space=vmem, size = 0x4b000, scoped, tag = 'input window, operand 5, single buffered']
    #allocation6 [shape = 's32[1]{0}', space=sflag, size = 0x4, scoped, tag = 'scoped memory for tpu_custom_call.1']
    %16 = vsyncpa [#allocation4], 0
    %17 = vsyncpa [#allocation6], 0
    // Predicated region
    $region2: #{tpu_custom_call.1} parent=1 // pred_check
      _
    $region3: #{tpu_custom_call.1} parent=1 // pred_check_branch
      %19 = sbr.rel (0) target = $region5
    $region4: #{tpu_custom_call.1} parent=1 // pred_region
      _
    $region5: #{tpu_custom_call.1} parent=1 // pred_fallthru
      _
    // Predicated region
    $region6: #{tpu_custom_call.1} parent=1 // pred_check
      _
    $region7: #{tpu_custom_call.1} parent=1 // pred_check_branch
      %21 = sbr.rel (0) target = $region9
    $region8: #{tpu_custom_call.1} parent=1 // pred_region
      _
    $region9: #{tpu_custom_call.1} parent=1 // pred_fallthru
      _
    // Predicated region
    $region10: #{tpu_custom_call.1} parent=1 // pred_check
      _
    $region11: #{tpu_custom_call.1} parent=1 // pred_check_branch
      %23 = sbr.rel (0) target = $region13
    $region12: #{tpu_custom_call.1} parent=1 // pred_region
      %s25 = ssub.s32 512, 512
      %26 = vsyncadd [#allocation4], %s25
      %s27 = sshll.u32 [#allocation3], 4
      %s28 = int_to_ptr.vmem [resolvable:$true] %s27
      %33 = dma.hbm_to_vmem [thread:$0]  %s2, 512, %s28, [#allocation4], 256, 256, 16
    $region13: #{tpu_custom_call.1} parent=1 // pred_fallthru
      _
    // Predicated region
    $region14: #{tpu_custom_call.1} parent=1 // pred_check
      _
    $region15: #{tpu_custom_call.1} parent=1 // pred_check_branch
      %35 = sbr.rel (0) target = $region17
    $region16: #{tpu_custom_call.1} parent=1 // pred_region
      _
    $region17: #{tpu_custom_call.1} parent=1 // pred_fallthru
      _
    // Predicated region
    $region18: #{tpu_custom_call.1} parent=1 // pred_check
      _
    $region19: #{tpu_custom_call.1} parent=1 // pred_check_branch
      %37 = sbr.rel (0) target = $region21
    $region20: #{tpu_custom_call.1} parent=1 // pred_region
      _
    $region21: #{tpu_custom_call.1} parent=1 // pred_fallthru
      _
    // Predicated region
    $region22: #{tpu_custom_call.1} parent=1 // pred_check
      _
    $region23: #{tpu_custom_call.1} parent=1 // pred_check_branch
      %39 = sbr.rel (0) target = $region25
    $region24: #{tpu_custom_call.1} parent=1 // pred_region
      %s41 = ssub.s32 9600, 9600
      %42 = vsyncadd [#allocation6], %s41
      %s43 = sshll.u32 [#allocation5], 4
      %s44 = int_to_ptr.vmem [resolvable:$true] %s43
      %49 = dma.hbm_to_vmem [thread:$0]  %s5, 9600, %s44, [#allocation6], 192, 192, 12
    $region25: #{tpu_custom_call.1} parent=1 // pred_fallthru
      _
    // Predicated region
    $region26: #{tpu_custom_call.1} parent=1 // pred_check
      _
    $region27: #{tpu_custom_call.1} parent=1 // pred_check_branch
      %51 = sbr.rel (0) target = $region29
    $region28: #{tpu_custom_call.1} parent=1 // pred_region
      _
    $region29: #{tpu_custom_call.1} parent=1 // pred_fallthru
      _
    // Predicated region
    $region30: #{tpu_custom_call.1} parent=1 // pred_check
      _
    $region31: #{tpu_custom_call.1} parent=1 // pred_check_branch
      %53 = sbr.rel (0) target = $region33
    $region32: #{tpu_custom_call.1} parent=1 // pred_region
      _
    $region33: #{tpu_custom_call.1} parent=1 // pred_fallthru
      _
    // Predicated region
    $region34: #{tpu_custom_call.1} parent=1 // pred_check
      _
    $region35: #{tpu_custom_call.1} parent=1 // pred_check_branch
      %55 = sbr.rel (0) target = $region37
    $region36: #{tpu_custom_call.1} parent=1 // pred_region
      _
    $region37: #{tpu_custom_call.1} parent=1 // pred_fallthru
      _
    // Predicated region
    $region38: #{tpu_custom_call.1} parent=1 // pred_check
      _
    $region39: #{tpu_custom_call.1} parent=1 // pred_check_branch
      %57 = sbr.rel (0) target = $region41
    $region40: #{tpu_custom_call.1} parent=1 // pred_region
      %58 = dma.done [#allocation4], 512
    $region41: #{tpu_custom_call.1} parent=1 // pred_fallthru
      _
    // Predicated region
    $region42: #{tpu_custom_call.1} parent=1 // pred_check
      _
    $region43: #{tpu_custom_call.1} parent=1 // pred_check_branch
      %60 = sbr.rel (0) target = $region45
    $region44: #{tpu_custom_call.1} parent=1 // pred_region
      %61 = dma.done [#allocation6], 9600
    $region45: #{tpu_custom_call.1} parent=1 // pred_fallthru
      _
    %v63 = vld [vmem:[%s0] sm:$0xff]
    %v64 = vpack.c.bf16 %v63, %v63
    %v65 = vld [vmem:[%s1] sm:$0xff]
    %v66 = vpack.c.bf16 %v65, %v65
    %v67 = vld [vmem:[#allocation3] sm:$0xff]
    %v68 = vld [vmem:[#allocation3 + $0x8] sm:$0xff]
    %v69 = vld [vmem:[#allocation3 + $0x10] sm:$0xff]
    %v70 = vld [vmem:[#allocation3 + $0x18] sm:$0xff]
    %v71 = vld [vmem:[%s3] sm:$0xff]
    %v73 = vcombine.high %v71, %v71
    %v75 = vunpack.c.l.s4 1983009808
    %v76 = vunpack.c.0.s8 %v75
    %v77 = vlaneseq
    %v78 = vshrl.u32 %v77, 7
    %v79 = vsub.s32 %v76, %v78
    %v80 = vrot.slane %v71, %v79
    %v82 = vunpack.c.l.s4 1983009808
    %v83 = vunpack.c.0.s8 %v82
    %v84 = vlaneseq
    %v85 = vshrl.u32 %v84, 7
    %v86 = vsub.s32 %v83, %v85
    %v87 = vrot.slane %v73, %v86
    %v88 = vcombine.high %v80, %v80
    %v89 = vcombine.high %v87, %v87
    %vm90 = vcmask 31744
    %v92 = vsel %vm90, %v66, 0
    %vm94 = vcmask 1041408
    %v96 = vsel %vm94, %v80, 0
    %v99 = vsel %vm94, %v88, 0
    %v102 = vsel %vm94, %v87, 0
    %v105 = vsel %vm94, %v89, 0
    %107 = vmatprep.subr.bf16.mxu0 %v99
    %108 = vmatpush1.bf16.msra.mxu0 %v96
    %109 = vmatprep.subr.bf16.mxu0 0
    %110 = vmatpush1.bf16.msra.mxu0 0
    %111 = vmatprep.subr.bf16.mxu0 0
    %112 = vmatpush1.bf16.msra.mxu0 0
    %113 = vmatprep.subr.bf16.mxu0 0
    %114 = vmatpush1.bf16.msra.mxu0 0
    %115 = vmatprep.subr.bf16.mxu0 0
    %116 = vmatpush1.bf16.msra.mxu0 0
    %117 = vmatprep.subr.bf16.mxu0 0
    %118 = vmatpush1.bf16.msra.mxu0 0
    %119 = vmatprep.subr.bf16.mxu0 0
    %120 = vmatpush1.bf16.msra.mxu0 0
    %121 = vmatprep.subr.bf16.mxu0 0
    %122 = vmatpush1.bf16.msra.mxu0 0
    %123 = vmatprep.subr.bf16.mxu0 0
    %124 = vmatpush1.bf16.msra.mxu0 0
    %125 = vmatprep.subr.bf16.mxu0 0
    %126 = vmatpush1.bf16.msra.mxu0 0
    %127 = vmatprep.subr.bf16.mxu0 0
    %128 = vmatpush1.bf16.msra.mxu0 0
    %129 = vmatprep.subr.bf16.mxu0 0
    %130 = vmatpush1.bf16.msra.mxu0 0
    %131 = vmatprep.subr.bf16.mxu0 0
    %132 = vmatpush1.bf16.msra.mxu0 0
    %133 = vmatprep.subr.bf16.mxu0 0
    %134 = vmatpush1.bf16.msra.mxu0 0
    %135 = vmatprep.subr.bf16.mxu0 0
    %136 = vmatpush1.bf16.msra.mxu0 0
    %137 = vmatprep.subr.bf16.mxu0 0
    %138 = vmatpush1.bf16.msra.mxu0 0
    %139 = vmatprep.mubr.bf16.mxu0 0
    %140 = vmatmul.mubr.bf16.gmra.mrb[0].mxu0 %v92
    %v141 = vpop.f32.mrb[0].mxu0
    %v142 = vadd.f32 0.0, %v141
    %v143 = vpop.f32.mrb[0].mxu0
    %v144 = vadd.f32 0.0, %v143
    %v145 = vpop.f32.mrb[0].mxu0
    %v146 = vpop.f32.mrb[0].mxu0
    %147 = vdwg.mxu0
    %148 = vmatprep.subr.bf16.mxu0 %v105
    %149 = vmatpush1.bf16.msra.mxu0 %v102
    %150 = vmatprep.subr.bf16.mxu0 0
    %151 = vmatpush1.bf16.msra.mxu0 0
    %152 = vmatprep.subr.bf16.mxu0 0
    %153 = vmatpush1.bf16.msra.mxu0 0
    %154 = vmatprep.subr.bf16.mxu0 0
    %155 = vmatpush1.bf16.msra.mxu0 0
    %156 = vmatprep.subr.bf16.mxu0 0
    %157 = vmatpush1.bf16.msra.mxu0 0
    %158 = vmatprep.subr.bf16.mxu0 0
    %159 = vmatpush1.bf16.msra.mxu0 0
    %160 = vmatprep.subr.bf16.mxu0 0
    %161 = vmatpush1.bf16.msra.mxu0 0
    %162 = vmatprep.subr.bf16.mxu0 0
    %163 = vmatpush1.bf16.msra.mxu0 0
    %164 = vmatprep.subr.bf16.mxu0 0
    %165 = vmatpush1.bf16.msra.mxu0 0
    %166 = vmatprep.subr.bf16.mxu0 0
    %167 = vmatpush1.bf16.msra.mxu0 0
    %168 = vmatprep.subr.bf16.mxu0 0
    %169 = vmatpush1.bf16.msra.mxu0 0
    %170 = vmatprep.subr.bf16.mxu0 0
    %171 = vmatpush1.bf16.msra.mxu0 0
    %172 = vmatprep.subr.bf16.mxu0 0
    %173 = vmatpush1.bf16.msra.mxu0 0
    %174 = vmatprep.subr.bf16.mxu0 0
    %175 = vmatpush1.bf16.msra.mxu0 0
    %176 = vmatprep.subr.bf16.mxu0 0
    %177 = vmatpush1.bf16.msra.mxu0 0
    %178 = vmatprep.subr.bf16.mxu0 0
    %179 = vmatpush1.bf16.msra.mxu0 0
    %180 = vmatprep.mubr.bf16.mxu0 0
    %181 = vmatmul.mubr.bf16.gmra.mrb[0].mxu0 %v92
    %v182 = vpop.f32.mrb[0].mxu0
    %v183 = vadd.f32 0.0, %v182
    %v184 = vpop.f32.mrb[0].mxu0
    %v185 = vadd.f32 0.0, %v184
    %v186 = vpop.f32.mrb[0].mxu0
    %v187 = vpop.f32.mrb[0].mxu0
    %188 = vdwg.mxu0
    %v193 = vunpack.c.l.b16 %v67
    %v194 = vunpack.c.h.b16 %v67
    %v195 = vunpack.c.l.b16 %v68
    %v196 = vunpack.c.h.b16 %v68
    %v197 = vunpack.c.l.b16 %v69
    %v198 = vunpack.c.h.b16 %v69
    %v199 = vunpack.c.l.b16 %v70
    %v200 = vunpack.c.h.b16 %v70
    %v201 = vpack.c.b16 %v197, %v193
    %v202 = vpack.c.b16 %v198, %v194
    %v203 = vpack.c.b16 %v199, %v195
    %v204 = vpack.c.b16 %v200, %v196
    %vm209 = vcmask 130048
    %v211 = vsel %vm209, %v64, 0
    %213 = vmatprep.subr.bf16.mxu0 %v202
    %214 = vmatpush1.bf16.msra.mxu0 %v201
    %215 = vmatprep.subr.bf16.mxu0 0
    %216 = vmatpush1.bf16.msra.mxu0 0
    %217 = vmatprep.subr.bf16.mxu0 0
    %218 = vmatpush1.bf16.msra.mxu0 0
    %219 = vmatprep.subr.bf16.mxu0 0
    %220 = vmatpush1.bf16.msra.mxu0 0
    %221 = vmatprep.subr.bf16.mxu0 0
    %222 = vmatpush1.bf16.msra.mxu0 0
    %223 = vmatprep.subr.bf16.mxu0 0
    %224 = vmatpush1.bf16.msra.mxu0 0
    %225 = vmatprep.subr.bf16.mxu0 0
    %226 = vmatpush1.bf16.msra.mxu0 0
    %227 = vmatprep.subr.bf16.mxu0 0
    %228 = vmatpush1.bf16.msra.mxu0 0
    %229 = vmatprep.subr.bf16.mxu0 0
    %230 = vmatpush1.bf16.msra.mxu0 0
    %231 = vmatprep.subr.bf16.mxu0 0
    %232 = vmatpush1.bf16.msra.mxu0 0
    %233 = vmatprep.subr.bf16.mxu0 0
    %234 = vmatpush1.bf16.msra.mxu0 0
    %235 = vmatprep.subr.bf16.mxu0 0
    %236 = vmatpush1.bf16.msra.mxu0 0
    %237 = vmatprep.subr.bf16.mxu0 0
    %238 = vmatpush1.bf16.msra.mxu0 0
    %239 = vmatprep.subr.bf16.mxu0 0
    %240 = vmatpush1.bf16.msra.mxu0 0
    %241 = vmatprep.subr.bf16.mxu0 0
    %242 = vmatpush1.bf16.msra.mxu0 0
    %243 = vmatprep.subr.bf16.mxu0 0
    %244 = vmatpush1.bf16.msra.mxu0 0
    %245 = vmatprep.mubr.bf16.mxu0 0
    %246 = vmatmul.mubr.bf16.gmra.mrb[0].mxu0 %v211
    %v247 = vpop.f32.mrb[0].mxu0
    %v248 = vadd.f32 %v142, %v247
    %v249 = vpop.f32.mrb[0].mxu0
    %v250 = vadd.f32 %v144, %v249
    %v251 = vpop.f32.mrb[0].mxu0
    %v252 = vpop.f32.mrb[0].mxu0
    %253 = vdwg.mxu0
    %254 = vmatprep.subr.bf16.mxu0 %v204
    %255 = vmatpush1.bf16.msra.mxu0 %v203
    %256 = vmatprep.subr.bf16.mxu0 0
    %257 = vmatpush1.bf16.msra.mxu0 0
    %258 = vmatprep.subr.bf16.mxu0 0
    %259 = vmatpush1.bf16.msra.mxu0 0
    %260 = vmatprep.subr.bf16.mxu0 0
    %261 = vmatpush1.bf16.msra.mxu0 0
    %262 = vmatprep.subr.bf16.mxu0 0
    %263 = vmatpush1.bf16.msra.mxu0 0
    %264 = vmatprep.subr.bf16.mxu0 0
    %265 = vmatpush1.bf16.msra.mxu0 0
    %266 = vmatprep.subr.bf16.mxu0 0
    %267 = vmatpush1.bf16.msra.mxu0 0
    %268 = vmatprep.subr.bf16.mxu0 0
    %269 = vmatpush1.bf16.msra.mxu0 0
    %270 = vmatprep.subr.bf16.mxu0 0
    %271 = vmatpush1.bf16.msra.mxu0 0
    %272 = vmatprep.subr.bf16.mxu0 0
    %273 = vmatpush1.bf16.msra.mxu0 0
    %274 = vmatprep.subr.bf16.mxu0 0
    %275 = vmatpush1.bf16.msra.mxu0 0
    %276 = vmatprep.subr.bf16.mxu0 0
    %277 = vmatpush1.bf16.msra.mxu0 0
    %278 = vmatprep.subr.bf16.mxu0 0
    %279 = vmatpush1.bf16.msra.mxu0 0
    %280 = vmatprep.subr.bf16.mxu0 0
    %281 = vmatpush1.bf16.msra.mxu0 0
    %282 = vmatprep.subr.bf16.mxu0 0
    %283 = vmatpush1.bf16.msra.mxu0 0
    %284 = vmatprep.subr.bf16.mxu0 0
    %285 = vmatpush1.bf16.msra.mxu0 0
    %286 = vmatprep.mubr.bf16.mxu0 0
    %287 = vmatmul.mubr.bf16.gmra.mrb[0].mxu0 %v211
    %v288 = vpop.f32.mrb[0].mxu0
    %v289 = vadd.f32 %v183, %v288
    %v290 = vpop.f32.mrb[0].mxu0
    %v291 = vadd.f32 %v185, %v290
    %v292 = vpop.f32.mrb[0].mxu0
    %v293 = vpop.f32.mrb[0].mxu0
    %294 = vdwg.mxu0
    %v295 = vld [vmem:[%s4] sm:$0xf]
    %v297 = vlaneseq
    %v298 = vshrl.u32 %v297, 7
    %v299 = vsub.s32 0, %v298
    %v300 = vrot.slane %v295, %v299
    %v301 = vlaneseq
    %v302 = vshrl.u32 %v301, 7
    %v303 = vsub.s32 1, %v302
    %v304 = vrot.slane %v295, %v303
    %v305 = vlaneseq
    %v306 = vshrl.u32 %v305, 7
    %v307 = vsub.s32 2, %v306
    %v308 = vrot.slane %v295, %v307
    %v309 = vlaneseq
    %v310 = vshrl.u32 %v309, 7
    %v311 = vsub.s32 3, %v310
    %v312 = vrot.slane %v295, %v311
    %v317 = vadd.f32 %v248, %v300
    %v318 = vadd.f32 %v250, %v304
    %v319 = vadd.f32 %v289, %v308
    %v320 = vadd.f32 %v291, %v312
    %v321 = vmax.f32 %v317, 0.0
    %v322 = vmax.f32 %v318, 0.0
    %v323 = vmax.f32 %v319, 0.0
    %v324 = vmax.f32 %v320, 0.0
    %v325 = vpack.c.bf16 %v321, %v321
    %v326 = vpack.c.bf16 %v322, %v322
    %v327 = vpack.c.bf16 %v323, %v323
    %v328 = vpack.c.bf16 %v324, %v324
    %v329 = vld [vmem:[#allocation5] sm:$0xff]
    %v330 = vld [vmem:[#allocation5 + $0x8] sm:$0xf]
    %v331 = vld [vmem:[#allocation5 + $0xc] sm:$0xff]
    %v332 = vld [vmem:[#allocation5 + $0x14] sm:$0xf]
    %v333 = vld [vmem:[#allocation5 + $0x18] sm:$0xff]
    %v334 = vld [vmem:[#allocation5 + $0x20] sm:$0xf]
    %v335 = vld [vmem:[#allocation5 + $0x24] sm:$0xff]
    %v336 = vld [vmem:[#allocation5 + $0x2c] sm:$0xf]
    %v337 = vld [vmem:[#allocation5 + $0x30] sm:$0xff]
    %v338 = vld [vmem:[#allocation5 + $0x38] sm:$0xf]
    %v339 = vld [vmem:[#allocation5 + $0x3c] sm:$0xff]
    %v340 = vld [vmem:[#allocation5 + $0x44] sm:$0xf]
    %v341 = vld [vmem:[#allocation5 + $0x48] sm:$0xff]
    %v342 = vld [vmem:[#allocation5 + $0x50] sm:$0xf]
    %v343 = vld [vmem:[#allocation5 + $0x54] sm:$0xff]
    %v344 = vld [vmem:[#allocation5 + $0x5c] sm:$0xf]
    %v345 = vld [vmem:[#allocation5 + $0x60] sm:$0xff]
    %v346 = vld [vmem:[#allocation5 + $0x68] sm:$0xf]
    %v347 = vld [vmem:[#allocation5 + $0x6c] sm:$0xff]
    %v348 = vld [vmem:[#allocation5 + $0x74] sm:$0xf]
    %v349 = vld [vmem:[#allocation5 + $0x78] sm:$0xff]
    %v350 = vld [vmem:[#allocation5 + $0x80] sm:$0xf]
    %v351 = vld [vmem:[#allocation5 + $0x84] sm:$0xff]
    %v352 = vld [vmem:[#allocation5 + $0x8c] sm:$0xf]
    %v353 = vld [vmem:[#allocation5 + $0x90] sm:$0xff]
    %v354 = vld [vmem:[#allocation5 + $0x98] sm:$0xf]
    %v355 = vld [vmem:[#allocation5 + $0x9c] sm:$0xff]
    %v356 = vld [vmem:[#allocation5 + $0xa4] sm:$0xf]
    %v357 = vld [vmem:[#allocation5 + $0xa8] sm:$0xff]
    %v358 = vld [vmem:[#allocation5 + $0xb0] sm:$0xf]
    %v359 = vld [vmem:[#allocation5 + $0xb4] sm:$0xff]
    %v360 = vld [vmem:[#allocation5 + $0xbc] sm:$0xf]
    %v361 = vld [vmem:[#allocation5 + $0xc0] sm:$0xff]
    %v362 = vld [vmem:[#allocation5 + $0xc8] sm:$0xf]
    %v363 = vld [vmem:[#allocation5 + $0xcc] sm:$0xff]
    %v364 = vld [vmem:[#allocation5 + $0xd4] sm:$0xf]
    %v365 = vld [vmem:[#allocation5 + $0xd8] sm:$0xff]
    %v366 = vld [vmem:[#allocation5 + $0xe0] sm:$0xf]
    %v367 = vld [vmem:[#allocation5 + $0xe4] sm:$0xff]
    %v368 = vld [vmem:[#allocation5 + $0xec] sm:$0xf]
    %v369 = vld [vmem:[#allocation5 + $0xf0] sm:$0xff]
    %v370 = vld [vmem:[#allocation5 + $0xf8] sm:$0xf]
    %v371 = vld [vmem:[#allocation5 + $0xfc] sm:$0xff]
    %v372 = vld [vmem:[#allocation5 + $0x104] sm:$0xf]
    %v373 = vld [vmem:[#allocation5 + $0x108] sm:$0xff]
    %v374 = vld [vmem:[#allocation5 + $0x110] sm:$0xf]
    %v375 = vld [vmem:[#allocation5 + $0x114] sm:$0xff]
    %v376 = vld [vmem:[#allocation5 + $0x11c] sm:$0xf]
    %v377 = vld [vmem:[#allocation5 + $0x120] sm:$0xff]
    %v378 = vld [vmem:[#allocation5 + $0x128] sm:$0xf]
    %v379 = vld [vmem:[#allocation5 + $0x12c] sm:$0xff]
    %v380 = vld [vmem:[#allocation5 + $0x134] sm:$0xf]
    %v381 = vld [vmem:[#allocation5 + $0x138] sm:$0xff]
    %v382 = vld [vmem:[#allocation5 + $0x140] sm:$0xf]
    %v383 = vld [vmem:[#allocation5 + $0x144] sm:$0xff]
    %v384 = vld [vmem:[#allocation5 + $0x14c] sm:$0xf]
    %v385 = vld [vmem:[#allocation5 + $0x150] sm:$0xff]
    %v386 = vld [vmem:[#allocation5 + $0x158] sm:$0xf]
    %v387 = vld [vmem:[#allocation5 + $0x15c] sm:$0xff]
    %v388 = vld [vmem:[#allocation5 + $0x164] sm:$0xf]
    %v389 = vld [vmem:[#allocation5 + $0x168] sm:$0xff]
    %v390 = vld [vmem:[#allocation5 + $0x170] sm:$0xf]
    %v391 = vld [vmem:[#allocation5 + $0x174] sm:$0xff]
    %v392 = vld [vmem:[#allocation5 + $0x17c] sm:$0xf]
    %v393 = vld [vmem:[#allocation5 + $0x180] sm:$0xff]
    %v394 = vld [vmem:[#allocation5 + $0x188] sm:$0xf]
    %v395 = vld [vmem:[#allocation5 + $0x18c] sm:$0xff]
    %v396 = vld [vmem:[#allocation5 + $0x194] sm:$0xf]
    %v397 = vld [vmem:[#allocation5 + $0x198] sm:$0xff]
    %v398 = vld [vmem:[#allocation5 + $0x1a0] sm:$0xf]
    %v399 = vld [vmem:[#allocation5 + $0x1a4] sm:$0xff]
    %v400 = vld [vmem:[#allocation5 + $0x1ac] sm:$0xf]
    %v401 = vld [vmem:[#allocation5 + $0x1b0] sm:$0xff]
    %v402 = vld [vmem:[#allocation5 + $0x1b8] sm:$0xf]
    %v403 = vld [vmem:[#allocation5 + $0x1bc] sm:$0xff]
    %v404 = vld [vmem:[#allocation5 + $0x1c4] sm:$0xf]
    %v405 = vld [vmem:[#allocation5 + $0x1c8] sm:$0xff]
    %v406 = vld [vmem:[#allocation5 + $0x1d0] sm:$0xf]
    %v407 = vld [vmem:[#allocation5 + $0x1d4] sm:$0xff]
    %v408 = vld [vmem:[#allocation5 + $0x1dc] sm:$0xf]
    %v409 = vld [vmem:[#allocation5 + $0x1e0] sm:$0xff]
    %v410 = vld [vmem:[#allocation5 + $0x1e8] sm:$0xf]
    %v411 = vld [vmem:[#allocation5 + $0x1ec] sm:$0xff]
    %v412 = vld [vmem:[#allocation5 + $0x1f4] sm:$0xf]
    %v413 = vld [vmem:[#allocation5 + $0x1f8] sm:$0xff]
    %v414 = vld [vmem:[#allocation5 + $0x200] sm:$0xf]
    %v415 = vld [vmem:[#allocation5 + $0x204] sm:$0xff]
    %v416 = vld [vmem:[#allocation5 + $0x20c] sm:$0xf]
    %v417 = vld [vmem:[#allocation5 + $0x210] sm:$0xff]
    %v418 = vld [vmem:[#allocation5 + $0x218] sm:$0xf]
    %v419 = vld [vmem:[#allocation5 + $0x21c] sm:$0xff]
    %v420 = vld [vmem:[#allocation5 + $0x224] sm:$0xf]
    %v421 = vld [vmem:[#allocation5 + $0x228] sm:$0xff]
    %v422 = vld [vmem:[#allocation5 + $0x230] sm:$0xf]
    %v423 = vld [vmem:[#allocation5 + $0x234] sm:$0xff]
    %v424 = vld [vmem:[#allocation5 + $0x23c] sm:$0xf]
    %v425 = vld [vmem:[#allocation5 + $0x240] sm:$0xff]
    %v426 = vld [vmem:[#allocation5 + $0x248] sm:$0xf]
    %v427 = vld [vmem:[#allocation5 + $0x24c] sm:$0xff]
    %v428 = vld [vmem:[#allocation5 + $0x254] sm:$0xf]
    %v429 = vld [vmem:[%s6] sm:$0x7]
    %v431 = vlaneseq
    %v432 = vshrl.u32 %v431, 7
    %v433 = vsub.s32 0, %v432
    %v434 = vrot.slane %v429, %v433
    %v435 = vlaneseq
    %v436 = vshrl.u32 %v435, 7
    %v437 = vsub.s32 1, %v436
    %v438 = vrot.slane %v429, %v437
    %v439 = vlaneseq
    %v440 = vshrl.u32 %v439, 7
    %v441 = vsub.s32 2, %v440
    %v442 = vrot.slane %v429, %v441
    %v546 = vunpack.c.l.b16 %v329
    %v547 = vunpack.c.h.b16 %v329
    %v548 = vunpack.c.l.b16 %v330
    %v549 = vunpack.c.l.b16 %v331
    %v550 = vunpack.c.h.b16 %v331
    %v551 = vunpack.c.l.b16 %v332
    %v552 = vunpack.c.l.b16 %v333
    %v553 = vunpack.c.h.b16 %v333
    %v554 = vunpack.c.l.b16 %v334
    %v555 = vunpack.c.l.b16 %v335
    %v556 = vunpack.c.h.b16 %v335
    %v557 = vunpack.c.l.b16 %v336
    %v558 = vunpack.c.l.b16 %v337
    %v559 = vunpack.c.h.b16 %v337
    %v560 = vunpack.c.l.b16 %v338
    %v561 = vunpack.c.l.b16 %v339
    %v562 = vunpack.c.h.b16 %v339
    %v563 = vunpack.c.l.b16 %v340
    %v564 = vunpack.c.l.b16 %v341
    %v565 = vunpack.c.h.b16 %v341
    %v566 = vunpack.c.l.b16 %v342
    %v567 = vunpack.c.l.b16 %v343
    %v568 = vunpack.c.h.b16 %v343
    %v569 = vunpack.c.l.b16 %v344
    %v570 = vunpack.c.l.b16 %v345
    %v571 = vunpack.c.h.b16 %v345
    %v572 = vunpack.c.l.b16 %v346
    %v573 = vunpack.c.l.b16 %v347
    %v574 = vunpack.c.h.b16 %v347
    %v575 = vunpack.c.l.b16 %v348
    %v576 = vunpack.c.l.b16 %v349
    %v577 = vunpack.c.h.b16 %v349
    %v578 = vunpack.c.l.b16 %v350
    %v579 = vunpack.c.l.b16 %v351
    %v580 = vunpack.c.h.b16 %v351
    %v581 = vunpack.c.l.b16 %v352
    %v582 = vunpack.c.l.b16 %v353
    %v583 = vunpack.c.h.b16 %v353
    %v584 = vunpack.c.l.b16 %v354
    %v585 = vunpack.c.l.b16 %v355
    %v586 = vunpack.c.h.b16 %v355
    %v587 = vunpack.c.l.b16 %v356
    %v588 = vunpack.c.l.b16 %v357
    %v589 = vunpack.c.h.b16 %v357
    %v590 = vunpack.c.l.b16 %v358
    %v591 = vunpack.c.l.b16 %v359
    %v592 = vunpack.c.h.b16 %v359
    %v593 = vunpack.c.l.b16 %v360
    %v594 = vunpack.c.l.b16 %v361
    %v595 = vunpack.c.h.b16 %v361
    %v596 = vunpack.c.l.b16 %v362
    %v597 = vunpack.c.l.b16 %v363
    %v598 = vunpack.c.h.b16 %v363
    %v599 = vunpack.c.l.b16 %v364
    %v600 = vunpack.c.l.b16 %v365
    %v601 = vunpack.c.h.b16 %v365
    %v602 = vunpack.c.l.b16 %v366
    %v603 = vunpack.c.l.b16 %v367
    %v604 = vunpack.c.h.b16 %v367
    %v605 = vunpack.c.l.b16 %v368
    %v606 = vunpack.c.l.b16 %v369
    %v607 = vunpack.c.h.b16 %v369
    %v608 = vunpack.c.l.b16 %v370
    %v609 = vunpack.c.l.b16 %v371
    %v610 = vunpack.c.h.b16 %v371
    %v611 = vunpack.c.l.b16 %v372
    %v612 = vunpack.c.l.b16 %v373
    %v613 = vunpack.c.h.b16 %v373
    %v614 = vunpack.c.l.b16 %v374
    %v615 = vunpack.c.l.b16 %v375
    %v616 = vunpack.c.h.b16 %v375
    %v617 = vunpack.c.l.b16 %v376
    %v618 = vunpack.c.l.b16 %v377
    %v619 = vunpack.c.h.b16 %v377
    %v620 = vunpack.c.l.b16 %v378
    %v621 = vunpack.c.l.b16 %v379
    %v622 = vunpack.c.h.b16 %v379
    %v623 = vunpack.c.l.b16 %v380
    %v624 = vunpack.c.l.b16 %v381
    %v625 = vunpack.c.h.b16 %v381
    %v626 = vunpack.c.l.b16 %v382
    %v627 = vunpack.c.l.b16 %v383
    %v628 = vunpack.c.h.b16 %v383
    %v629 = vunpack.c.l.b16 %v384
    %v630 = vunpack.c.l.b16 %v385
    %v631 = vunpack.c.h.b16 %v385
    %v632 = vunpack.c.l.b16 %v386
    %v633 = vunpack.c.l.b16 %v387
    %v634 = vunpack.c.h.b16 %v387
    %v635 = vunpack.c.l.b16 %v388
    %v636 = vunpack.c.l.b16 %v389
    %v637 = vunpack.c.h.b16 %v389
    %v638 = vunpack.c.l.b16 %v390
    %v639 = vunpack.c.l.b16 %v391
    %v640 = vunpack.c.h.b16 %v391
    %v641 = vunpack.c.l.b16 %v392
    %v642 = vunpack.c.l.b16 %v393
    %v643 = vunpack.c.h.b16 %v393
    %v644 = vunpack.c.l.b16 %v394
    %v645 = vunpack.c.l.b16 %v395
    %v646 = vunpack.c.h.b16 %v395
    %v647 = vunpack.c.l.b16 %v396
    %v648 = vunpack.c.l.b16 %v397
    %v649 = vunpack.c.h.b16 %v397
    %v650 = vunpack.c.l.b16 %v398
    %v651 = vunpack.c.l.b16 %v399
    %v652 = vunpack.c.h.b16 %v399
    %v653 = vunpack.c.l.b16 %v400
    %v654 = vunpack.c.l.b16 %v401
    %v655 = vunpack.c.h.b16 %v401
    %v656 = vunpack.c.l.b16 %v402
    %v657 = vunpack.c.l.b16 %v403
    %v658 = vunpack.c.h.b16 %v403
    %v659 = vunpack.c.l.b16 %v404
    %v660 = vunpack.c.l.b16 %v405
    %v661 = vunpack.c.h.b16 %v405
    %v662 = vunpack.c.l.b16 %v406
    %v663 = vunpack.c.l.b16 %v407
    %v664 = vunpack.c.h.b16 %v407
    %v665 = vunpack.c.l.b16 %v408
    %v666 = vunpack.c.l.b16 %v409
    %v667 = vunpack.c.h.b16 %v409
    %v668 = vunpack.c.l.b16 %v410
    %v669 = vunpack.c.l.b16 %v411
    %v670 = vunpack.c.h.b16 %v411
    %v671 = vunpack.c.l.b16 %v412
    %v672 = vunpack.c.l.b16 %v413
    %v673 = vunpack.c.h.b16 %v413
    %v674 = vunpack.c.l.b16 %v414
    %v675 = vunpack.c.l.b16 %v415
    %v676 = vunpack.c.h.b16 %v415
    %v677 = vunpack.c.l.b16 %v416
    %v678 = vunpack.c.l.b16 %v417
    %v679 = vunpack.c.h.b16 %v417
    %v680 = vunpack.c.l.b16 %v418
    %v681 = vunpack.c.l.b16 %v419
    %v682 = vunpack.c.h.b16 %v419
    %v683 = vunpack.c.l.b16 %v420
    %v684 = vunpack.c.l.b16 %v421
    %v685 = vunpack.c.h.b16 %v421
    %v686 = vunpack.c.l.b16 %v422
    %v687 = vunpack.c.l.b16 %v423
    %v688 = vunpack.c.h.b16 %v423
    %v689 = vunpack.c.l.b16 %v424
    %v690 = vunpack.c.l.b16 %v425
    %v691 = vunpack.c.h.b16 %v425
    %v692 = vunpack.c.l.b16 %v426
    %v693 = vunpack.c.l.b16 %v427
    %v694 = vunpack.c.h.b16 %v427
    %v695 = vunpack.c.l.b16 %v428
    %v696 = vpack.c.b16 %v549, %v546
    %v697 = vpack.c.b16 %v550, %v547
    %v698 = vpack.c.b16 %v551, %v548
    %v699 = vpack.c.b16 %v555, %v552
    %v700 = vpack.c.b16 %v556, %v553
    %v701 = vpack.c.b16 %v557, %v554
    %v702 = vpack.c.b16 %v561, %v558
    %v703 = vpack.c.b16 %v562, %v559
    %v704 = vpack.c.b16 %v563, %v560
    %v705 = vpack.c.b16 %v567, %v564
    %v706 = vpack.c.b16 %v568, %v565
    %v707 = vpack.c.b16 %v569, %v566
    %v708 = vpack.c.b16 %v573, %v570
    %v709 = vpack.c.b16 %v574, %v571
    %v710 = vpack.c.b16 %v575, %v572
    %v711 = vpack.c.b16 %v579, %v576
    %v712 = vpack.c.b16 %v580, %v577
    %v713 = vpack.c.b16 %v581, %v578
    %v714 = vpack.c.b16 %v585, %v582
    %v715 = vpack.c.b16 %v586, %v583
    %v716 = vpack.c.b16 %v587, %v584
    %v717 = vpack.c.b16 %v591, %v588
    %v718 = vpack.c.b16 %v592, %v589
    %v719 = vpack.c.b16 %v593, %v590
    %v720 = vpack.c.b16 %v597, %v594
    %v721 = vpack.c.b16 %v598, %v595
    %v722 = vpack.c.b16 %v599, %v596
    %v723 = vpack.c.b16 %v603, %v600
    %v724 = vpack.c.b16 %v604, %v601
    %v725 = vpack.c.b16 %v605, %v602
    %v726 = vpack.c.b16 %v609, %v606
    %v727 = vpack.c.b16 %v610, %v607
    %v728 = vpack.c.b16 %v611, %v608
    %v729 = vpack.c.b16 %v615, %v612
    %v730 = vpack.c.b16 %v616, %v613
    %v731 = vpack.c.b16 %v617, %v614
    %v732 = vpack.c.b16 %v621, %v618
    %v733 = vpack.c.b16 %v622, %v619
    %v734 = vpack.c.b16 %v623, %v620
    %v735 = vpack.c.b16 %v627, %v624
    %v736 = vpack.c.b16 %v628, %v625
    %v737 = vpack.c.b16 %v629, %v626
    %v738 = vpack.c.b16 %v633, %v630
    %v739 = vpack.c.b16 %v634, %v631
    %v740 = vpack.c.b16 %v635, %v632
    %v741 = vpack.c.b16 %v639, %v636
    %v742 = vpack.c.b16 %v640, %v637
    %v743 = vpack.c.b16 %v641, %v638
    %v744 = vpack.c.b16 %v645, %v642
    %v745 = vpack.c.b16 %v646, %v643
    %v746 = vpack.c.b16 %v647, %v644
    %v747 = vpack.c.b16 %v651, %v648
    %v748 = vpack.c.b16 %v652, %v649
    %v749 = vpack.c.b16 %v653, %v650
    %v750 = vpack.c.b16 %v657, %v654
    %v751 = vpack.c.b16 %v658, %v655
    %v752 = vpack.c.b16 %v659, %v656
    %v753 = vpack.c.b16 %v663, %v660
    %v754 = vpack.c.b16 %v664, %v661
    %v755 = vpack.c.b16 %v665, %v662
    %v756 = vpack.c.b16 %v669, %v666
    %v757 = vpack.c.b16 %v670, %v667
    %v758 = vpack.c.b16 %v671, %v668
    %v759 = vpack.c.b16 %v675, %v672
    %v760 = vpack.c.b16 %v676, %v673
    %v761 = vpack.c.b16 %v677, %v674
    %v762 = vpack.c.b16 %v681, %v678
    %v763 = vpack.c.b16 %v682, %v679
    %v764 = vpack.c.b16 %v683, %v680
    %v765 = vpack.c.b16 %v687, %v684
    %v766 = vpack.c.b16 %v688, %v685
    %v767 = vpack.c.b16 %v689, %v686
    %v768 = vpack.c.b16 %v693, %v690
    %v769 = vpack.c.b16 %v694, %v691
    %v770 = vpack.c.b16 %v695, %v692
    %v847 = vsel %vm209, %v328, 0
    %849 = vmatprep.subr.bf16.mxu0 %v697
    %850 = vmatpush1.bf16.msra.mxu0 %v696
    %851 = vmatprep.subr.bf16.mxu0 %v700
    %852 = vmatpush1.bf16.msra.mxu0 %v699
    %853 = vmatprep.subr.bf16.mxu0 %v703
    %854 = vmatpush1.bf16.msra.mxu0 %v702
    %855 = vmatprep.subr.bf16.mxu0 %v706
    %856 = vmatpush1.bf16.msra.mxu0 %v705
    %857 = vmatprep.subr.bf16.mxu0 %v709
    %858 = vmatpush1.bf16.msra.mxu0 %v708
    %859 = vmatprep.subr.bf16.mxu0 %v712
    %860 = vmatpush1.bf16.msra.mxu0 %v711
    %861 = vmatprep.subr.bf16.mxu0 %v715
    %862 = vmatpush1.bf16.msra.mxu0 %v714
    %863 = vmatprep.subr.bf16.mxu0 %v718
    %864 = vmatpush1.bf16.msra.mxu0 %v717
    %865 = vmatprep.subr.bf16.mxu0 %v721
    %866 = vmatpush1.bf16.msra.mxu0 %v720
    %867 = vmatprep.subr.bf16.mxu0 %v724
    %868 = vmatpush1.bf16.msra.mxu0 %v723
    %869 = vmatprep.subr.bf16.mxu0 %v727
    %870 = vmatpush1.bf16.msra.mxu0 %v726
    %871 = vmatprep.subr.bf16.mxu0 %v730
    %872 = vmatpush1.bf16.msra.mxu0 %v729
    %873 = vmatprep.subr.bf16.mxu0 %v733
    %874 = vmatpush1.bf16.msra.mxu0 %v732
    %875 = vmatprep.subr.bf16.mxu0 %v736
    %876 = vmatpush1.bf16.msra.mxu0 %v735
    %877 = vmatprep.subr.bf16.mxu0 %v739
    %878 = vmatpush1.bf16.msra.mxu0 %v738
    %879 = vmatprep.subr.bf16.mxu0 %v742
    %880 = vmatpush1.bf16.msra.mxu0 %v741
    %881 = vmatprep.mubr.bf16.mxu0 %v326
    %882 = vmatmul.mubr.bf16.gmra.mrb[0].mxu0 %v325
    %v883 = vpop.f32.mrb[0].mxu0
    %v884 = vadd.f32 %v434, %v883
    %v885 = vpop.f32.mrb[0].mxu0
    %v886 = vadd.f32 %v438, %v885
    %v887 = vpop.f32.mrb[0].mxu0
    %v888 = vpop.f32.mrb[0].mxu0
    %889 = vdwg.mxu0
    %890 = vmatprep.subr.bf16.mxu0 %v745
    %891 = vmatpush1.bf16.msra.mxu0 %v744
    %892 = vmatprep.subr.bf16.mxu0 %v748
    %893 = vmatpush1.bf16.msra.mxu0 %v747
    %894 = vmatprep.subr.bf16.mxu0 %v751
    %895 = vmatpush1.bf16.msra.mxu0 %v750
    %896 = vmatprep.subr.bf16.mxu0 %v754
    %897 = vmatpush1.bf16.msra.mxu0 %v753
    %898 = vmatprep.subr.bf16.mxu0 %v757
    %899 = vmatpush1.bf16.msra.mxu0 %v756
    %900 = vmatprep.subr.bf16.mxu0 %v760
    %901 = vmatpush1.bf16.msra.mxu0 %v759
    %902 = vmatprep.subr.bf16.mxu0 %v763
    %903 = vmatpush1.bf16.msra.mxu0 %v762
    %904 = vmatprep.subr.bf16.mxu0 %v766
    %905 = vmatpush1.bf16.msra.mxu0 %v765
    %906 = vmatprep.subr.bf16.mxu0 %v769
    %907 = vmatpush1.bf16.msra.mxu0 %v768
    %908 = vmatprep.subr.bf16.mxu0 0
    %909 = vmatpush1.bf16.msra.mxu0 0
    %910 = vmatprep.subr.bf16.mxu0 0
    %911 = vmatpush1.bf16.msra.mxu0 0
    %912 = vmatprep.subr.bf16.mxu0 0
    %913 = vmatpush1.bf16.msra.mxu0 0
    %914 = vmatprep.subr.bf16.mxu0 0
    %915 = vmatpush1.bf16.msra.mxu0 0
    %916 = vmatprep.subr.bf16.mxu0 0
    %917 = vmatpush1.bf16.msra.mxu0 0
    %918 = vmatprep.subr.bf16.mxu0 0
    %919 = vmatpush1.bf16.msra.mxu0 0
    %920 = vmatprep.subr.bf16.mxu0 0
    %921 = vmatpush1.bf16.msra.mxu0 0
    %922 = vmatprep.mubr.bf16.mxu0 %v847
    %923 = vmatmul.mubr.bf16.gmra.mrb[0].mxu0 %v327
    %v924 = vpop.f32.mrb[0].mxu0
    %v925 = vadd.f32 %v884, %v924
    %v926 = vpop.f32.mrb[0].mxu0
    %v927 = vadd.f32 %v886, %v926
    %v928 = vpop.f32.mrb[0].mxu0
    %v929 = vpop.f32.mrb[0].mxu0
    %930 = vdwg.mxu0
    %931 = vmatprep.subr.bf16.mxu0 0
    %932 = vmatpush1.bf16.msra.mxu0 %v698
    %933 = vmatprep.subr.bf16.mxu0 0
    %934 = vmatpush1.bf16.msra.mxu0 %v701
    %935 = vmatprep.subr.bf16.mxu0 0
    %936 = vmatpush1.bf16.msra.mxu0 %v704
    %937 = vmatprep.subr.bf16.mxu0 0
    %938 = vmatpush1.bf16.msra.mxu0 %v707
    %939 = vmatprep.subr.bf16.mxu0 0
    %940 = vmatpush1.bf16.msra.mxu0 %v710
    %941 = vmatprep.subr.bf16.mxu0 0
    %942 = vmatpush1.bf16.msra.mxu0 %v713
    %943 = vmatprep.subr.bf16.mxu0 0
    %944 = vmatpush1.bf16.msra.mxu0 %v716
    %945 = vmatprep.subr.bf16.mxu0 0
    %946 = vmatpush1.bf16.msra.mxu0 %v719
    %947 = vmatprep.subr.bf16.mxu0 0
    %948 = vmatpush1.bf16.msra.mxu0 %v722
    %949 = vmatprep.subr.bf16.mxu0 0
    %950 = vmatpush1.bf16.msra.mxu0 %v725
    %951 = vmatprep.subr.bf16.mxu0 0
    %952 = vmatpush1.bf16.msra.mxu0 %v728
    %953 = vmatprep.subr.bf16.mxu0 0
    %954 = vmatpush1.bf16.msra.mxu0 %v731
    %955 = vmatprep.subr.bf16.mxu0 0
    %956 = vmatpush1.bf16.msra.mxu0 %v734
    %957 = vmatprep.subr.bf16.mxu0 0
    %958 = vmatpush1.bf16.msra.mxu0 %v737
    %959 = vmatprep.subr.bf16.mxu0 0
    %960 = vmatpush1.bf16.msra.mxu0 %v740
    %961 = vmatprep.subr.bf16.mxu0 0
    %962 = vmatpush1.bf16.msra.mxu0 %v743
    %963 = vmatprep.mubr.bf16.mxu0 %v326
    %964 = vmatmul.mubr.bf16.gmra.mrb[0].mxu0 %v325
    %v965 = vpop.f32.mrb[0].mxu0
    %v966 = vadd.f32 %v442, %v965
    %v967 = vpop.f32.mrb[0].mxu0
    %v968 = vpop.f32.mrb[0].mxu0
    %v969 = vpop.f32.mrb[0].mxu0
    %970 = vdwg.mxu0
    %971 = vmatprep.subr.bf16.mxu0 0
    %972 = vmatpush1.bf16.msra.mxu0 %v746
    %973 = vmatprep.subr.bf16.mxu0 0
    %974 = vmatpush1.bf16.msra.mxu0 %v749
    %975 = vmatprep.subr.bf16.mxu0 0
    %976 = vmatpush1.bf16.msra.mxu0 %v752
    %977 = vmatprep.subr.bf16.mxu0 0
    %978 = vmatpush1.bf16.msra.mxu0 %v755
    %979 = vmatprep.subr.bf16.mxu0 0
    %980 = vmatpush1.bf16.msra.mxu0 %v758
    %981 = vmatprep.subr.bf16.mxu0 0
    %982 = vmatpush1.bf16.msra.mxu0 %v761
    %983 = vmatprep.subr.bf16.mxu0 0
    %984 = vmatpush1.bf16.msra.mxu0 %v764
    %985 = vmatprep.subr.bf16.mxu0 0
    %986 = vmatpush1.bf16.msra.mxu0 %v767
    %987 = vmatprep.subr.bf16.mxu0 0
    %988 = vmatpush1.bf16.msra.mxu0 %v770
    %989 = vmatprep.subr.bf16.mxu0 0
    %990 = vmatpush1.bf16.msra.mxu0 0
    %991 = vmatprep.subr.bf16.mxu0 0
    %992 = vmatpush1.bf16.msra.mxu0 0
    %993 = vmatprep.subr.bf16.mxu0 0
    %994 = vmatpush1.bf16.msra.mxu0 0
    %995 = vmatprep.subr.bf16.mxu0 0
    %996 = vmatpush1.bf16.msra.mxu0 0
    %997 = vmatprep.subr.bf16.mxu0 0
    %998 = vmatpush1.bf16.msra.mxu0 0
    %999 = vmatprep.subr.bf16.mxu0 0
    %1000 = vmatpush1.bf16.msra.mxu0 0
    %1001 = vmatprep.subr.bf16.mxu0 0
    %1002 = vmatpush1.bf16.msra.mxu0 0
    %1003 = vmatprep.mubr.bf16.mxu0 %v847
    %1004 = vmatmul.mubr.bf16.gmra.mrb[0].mxu0 %v327
    %v1005 = vpop.f32.mrb[0].mxu0
    %v1006 = vadd.f32 %v966, %v1005
    %v1007 = vpop.f32.mrb[0].mxu0
    %v1008 = vpop.f32.mrb[0].mxu0
    %v1009 = vpop.f32.mrb[0].mxu0
    %1010 = vdwg.mxu0
    %v1011 = vmax.f32 %v925, 0.0
    %v1012 = vmax.f32 %v927, 0.0
    %v1013 = vmax.f32 %v1006, 0.0
    %v1014 = vld [vmem:[%s7] sm:$0x7]
    %v1016 = vlaneseq
    %v1017 = vshrl.u32 %v1016, 7
    %v1018 = vsub.s32 0, %v1017
    %v1019 = vrot.slane %v1014, %v1018
    %v1020 = vlaneseq
    %v1021 = vshrl.u32 %v1020, 7
    %v1022 = vsub.s32 1, %v1021
    %v1023 = vrot.slane %v1014, %v1022
    %v1024 = vlaneseq
    %v1025 = vshrl.u32 %v1024, 7
    %v1026 = vsub.s32 2, %v1025
    %v1027 = vrot.slane %v1014, %v1026
    %v1031 = vmul.f32 %v1011, %v1019
    %v1032 = vmul.f32 %v1012, %v1023
    %v1033 = vmul.f32 %v1013, %v1027
    %v1034 = vadd.f32 %v1031, %v1032
    %vm1035 = vcmask 359424
    %v1036 = vsel %vm1035, %v1033, 0.0
    %v1037 = vadd.f32 %v1034, %v1036
    %1038 = vadd.xlane.f32.xlu0 %v1037
    %v1039 = vpop.xlane.xlu0 %1038
    %v1040 = vld [vmem:[#allocation2] sm:$0x1]
    %v1042 = vlaneseq
    %v1043 = vshrl.u32 %v1042, 7
    %v1044 = vsub.s32 0, %v1043
    %v1045 = vrot.slane %v1040, %v1044
    %v1047 = vadd.f32 %v1039, %v1045
    %vm1048 = vcmask 7168
    %1049 = vst.msk [vmem:[%s9] sm:$0xff] %vm1048, %v1047
    // Predicated region
    $region46: #{tpu_custom_call.1} parent=1 // pred_check
      _
    $region47: #{tpu_custom_call.1} parent=1 // pred_check_branch
      %1051 = sbr.rel (0) target = $region49
    $region48: #{tpu_custom_call.1} parent=1 // pred_region
      _
    $region49: #{tpu_custom_call.1} parent=1 // pred_fallthru
      _
    // Predicated region
    $region50: #{tpu_custom_call.1} parent=1 // pred_check
      _
    $region51: #{tpu_custom_call.1} parent=1 // pred_check_branch
      %1053 = sbr.rel (0) target = $region53
    $region52: #{tpu_custom_call.1} parent=1 // pred_region
      _
    $region53: #{tpu_custom_call.1} parent=1 // pred_fallthru
      _
    %1054 = vsyncpa [#allocation4], 1
    %1055 = vsyncpa [#allocation6], 1

</llo_original>
